<compile_context>
chip_gen: v7x
topology: tpu7x:2x2x1
jax: 0.10.0
libtpu: 0.0.40
codegen_flags: <defaults>
</compile_context>

<pallas_src>
import jax
import jax.numpy as jnp
from jax import lax
from jax.experimental import pallas as pl
from jax.experimental.pallas import tpu as pltpu


def _round_up(x, m):
    return ((x + m - 1) // m) * m


def _vmem_capacity_bytes():
    """Physical VMEM of the local chip; conservative fallback if unavailable."""
    try:
        cap = getattr(pltpu.get_tpu_info(), "vmem_capacity_bytes", None)
        if cap:
            return int(cap)
    except Exception:
        pass
    return 64 * 1024 * 1024  # v7x per-TC VMEM (smallest of v5e/v6e/v7x)


def _predictor_kernel(x_ref, w1_ref, b1_ref, g_ref, beta_ref, w2_ref, b2_ref,
                      out_ref):
    # Cast x to bf16 in-kernel (VPU filler under MXU/DMA), f32 accumulation.
    x = x_ref[...].astype(jnp.bfloat16)
    h = jnp.dot(x, w1_ref[...],
                preferred_element_type=jnp.float32) + b1_ref[...]

    # LayerNorm over hidden dim (biased variance, eps=1e-5: torch default).
    mu = jnp.mean(h, axis=-1, keepdims=True)
    var = jnp.mean((h - mu) * (h - mu), axis=-1, keepdims=True)
    hn = (h - mu) * lax.rsqrt(var + 1e-5)
    hn = hn * g_ref[...] + beta_ref[...]

    # ReLU, then bf16 for the second MXU pass.
    hr = jnp.maximum(hn, 0.0).astype(jnp.bfloat16)

    # Linear 2: (tile_b, H) @ (H, Cp) + (1, Cp), f32 accumulation.
    logits = jnp.dot(hr, w2_ref[...],
                     preferred_element_type=jnp.float32) + b2_ref[...]

    # Categorical(logits=...) normalization: logits - logsumexp(logits).
    m = jnp.max(logits, axis=-1, keepdims=True)
    lse = m + jnp.log(jnp.sum(jnp.exp(logits - m), axis=-1, keepdims=True))
    out_ref[...] = (logits - lse).astype(out_ref.dtype)


def _choose_tile_b(B, F, H, Cp, vmem_budget_bytes):
    """Largest row tile fitting the VMEM budget; balanced >=2 tiles for big B."""
    # Resident (single-buffered) weights, biases, LN params.
    resident = F * H * 2 + H * Cp * 2 + (3 * H) * 4 + Cp * 4
    # Per batch row:
    #   x tile   f32, double-buffered : 2 * F * 4
    #   out tile f32, double-buffered : 2 * Cp * 4
    #   f32 temps (h, hn, logits/exp) : (2*H + 2*Cp) * 4, hr bf16 : H * 2
    per_row = 2 * F * 4 + 2 * Cp * 4 + (2 * H + 2 * Cp) * 4 + H * 2
    tile = (vmem_budget_bytes - resident) // max(per_row, 1)
    tile = max(8, min(2048, int(tile)))
    if B >= 32:
        # At least two balanced tiles -> both v7x TensorCores get work;
        # one extra ~0.35us grid step is negligible on v5e/v6e.
        tile = min(tile, _round_up(pl.cdiv(B, 2), 16))
    tile = min(tile, _round_up(B, 8))
    if tile >= 16:
        tile = (tile // 16) * 16     # bf16-friendly sublane packing
    else:
        tile = (tile // 8) * 8
    return max(8, tile)


def object_number_predictor(fmap, params, out_dtype=jnp.float32):
    """fmap: (B, dim_feature) f32. Returns normalized logits (B, num_classes)."""
    w1, b1, gamma, beta, w2, b2 = params
    B, F = fmap.shape
    H = w1.shape[1]
    C = w2.shape[1]

    # Lane-dense output: pad class dim to a multiple of 128. Padded classes get
    # a -1e30 bias so exp() underflows and the logsumexp is unchanged.
    # TODO(synk): for C << 128 a masked (B, C) store may beat padding+slice;
    # benchmark end-to-end if that config matters.
    Cp = _round_up(C, 128)

    cap = _vmem_capacity_bytes()
    tile_b = _choose_tile_b(B, F, H, Cp, int(cap * 0.70))
    grid_b = pl.cdiv(B, tile_b)          # ragged last block is fine (row-wise math)

    x = fmap.astype(jnp.float32)         # bf16 cast happens inside the kernel
    w1b = w1.astype(jnp.bfloat16)
    w2b = w2.astype(jnp.bfloat16)
    b1r = b1.reshape(1, H).astype(jnp.float32)
    gr = gamma.reshape(1, H).astype(jnp.float32)
    br = beta.reshape(1, H).astype(jnp.float32)
    b2r = b2.reshape(1, C).astype(jnp.float32)
    if Cp != C:
        w2b = jnp.pad(w2b, ((0, 0), (0, Cp - C)))
        b2r = jnp.pad(b2r, ((0, 0), (0, Cp - C)), constant_values=-1e30)

    out_itemsize = jnp.dtype(out_dtype).itemsize
    cost = pl.CostEstimate(
        flops=2 * B * F * H + 2 * B * H * Cp,
        transcendentals=B * (Cp + 2),
        bytes_accessed=(B * F * 4 + F * H * 2 + H * Cp * 2
                        + (3 * H + Cp) * 4 + B * Cp * out_itemsize),
    )
    vmem_limit = min(int(cap * 0.90), cap - (4 << 20))

    def run(single_buffer):
        def resident(shape):
            if single_buffer:
                # Constant index_map -> never re-DMA'd; 1 buffer is enough.
                return pl.BlockSpec(shape, lambda i: (0, 0),
                                    pipeline_mode=pl.Buffered(1))
            return pl.BlockSpec(shape, lambda i: (0, 0))

        return pl.pallas_call(
            _predictor_kernel,
            out_shape=jax.ShapeDtypeStruct((B, Cp), out_dtype),
            grid_spec=pltpu.PrefetchScalarGridSpec(
                num_scalar_prefetch=0,
                grid=(grid_b,),
                in_specs=[
                    pl.BlockSpec((tile_b, F), lambda i: (i, 0)),  # x (f32, pipelined)
                    resident((F, H)),    # W1       bf16, VMEM-resident
                    resident((1, H)),    # b1       f32
                    resident((1, H)),    # LN gamma f32
                    resident((1, H)),    # LN beta  f32
                    resident((H, Cp)),   # W2       bf16, VMEM-resident
                    resident((1, Cp)),   # b2       f32
                ],
                out_specs=pl.BlockSpec((tile_b, Cp), lambda i: (i, 0)),
            ),
            compiler_params=pltpu.CompilerParams(
                dimension_semantics=("parallel",),   # shards batch tiles over TCs
                vmem_limit_bytes=vmem_limit,
            ),
            cost_estimate=cost,
        )(x, w1b, b1r, gr, br, w2b, b2r)

    try:
        out = run(single_buffer=True)
    except Exception:
        # pipeline_mode=pl.Buffered(1) unsupported on this jax build; fall back
        # to default double-buffered resident specs (same semantics).
        out = run(single_buffer=False)

    return out if Cp == C else out[:, :C]


def init_params(key, dim_feature, dim_hidden=128, max_objects=127):
    """Deterministic synthetic parameters matching the PyTorch module's shapes."""
    num_classes = max_objects + 1
    k1, k2, k3, k4 = jax.random.split(key, 4)
    s1 = 1.0 / jnp.sqrt(dim_feature)
    s2 = 1.0 / jnp.sqrt(dim_hidden)
    w1 = jax.random.uniform(k1, (dim_feature, dim_hidden), jnp.float32, -s1, s1)
    b1 = jax.random.uniform(k2, (1, dim_hidden), jnp.float32, -s1, s1)
    gamma = jnp.ones((1, dim_hidden), jnp.float32)
    beta = jnp.zeros((1, dim_hidden), jnp.float32)
    w2 = jax.random.uniform(k3, (dim_hidden, num_classes), jnp.float32, -s2, s2)
    b2 = jax.random.uniform(k4, (1, num_classes), jnp.float32, -s2, s2)
    return (w1, b1, gamma, beta, w2, b2)


def _reference(fmap, params):
    """Pure-JAX f32 reference of the forward pass (correctness check)."""
    w1, b1, gamma, beta, w2, b2 = params
    h = fmap @ w1 + b1
    mu = jnp.mean(h, axis=-1, keepdims=True)
    var = jnp.mean((h - mu) ** 2, axis=-1, keepdims=True)
    hn = (h - mu) / jnp.sqrt(var + 1e-5) * gamma + beta
    logits = jnp.maximum(hn, 0.0) @ w2 + b2
    return logits - jax.scipy.special.logsumexp(logits, axis=-1, keepdims=True)


if __name__ == "__main__":
    key = jax.random.PRNGKey(0)
    kx, kx2, kp, kp2 = jax.random.split(key, 4)

    # Case 1: the module's default config (num_classes = 128, lane-dense).
    B, dim_feature, dim_hidden, max_objects = 8, 32, 128, 127
    fmap = jax.random.normal(kx, (B, dim_feature), jnp.float32)
    params = init_params(kp, dim_feature, dim_hidden, max_objects)

    out = jax.block_until_ready(object_number_predictor(fmap, params))
    ref = _reference(fmap, params)
    assert out.shape == (B, max_objects + 1)
    # bf16 MXU operands -> looser tolerance vs. the f32 reference.
    assert jnp.allclose(out, ref, atol=3e-2, rtol=3e-2)

    # Case 2: non-multiple-of-128 class count + ragged batch (B=24, tile=16)
    # -> exercises class padding and the masked last block.
    B2, max_objects2 = 24, 59
    fmap2 = jax.random.normal(kx2, (B2, dim_feature), jnp.float32)
    params2 = init_params(kp2, dim_feature, dim_hidden, max_objects2)
    out2 = jax.block_until_ready(object_number_predictor(fmap2, params2))
    ref2 = _reference(fmap2, params2)
    assert out2.shape == (B2, max_objects2 + 1)
    assert jnp.allclose(out2, ref2, atol=3e-2, rtol=3e-2)

    # Case 3: bf16 output (halves HBM writeback for large, mem-bound batches).
    out3 = jax.block_until_ready(
        object_number_predictor(fmap, params, out_dtype=jnp.bfloat16))
    assert out3.dtype == jnp.bfloat16
    assert jnp.allclose(out3.astype(jnp.float32), ref, atol=1e-1, rtol=1e-1)

    # TODO(synk): Categorical sampling/log_prob is left to the caller; the
    # kernel returns the distribution's normalized logits.
    print("KERNEL_OK")
</pallas_src>

<mosaic_0001>
module attributes {stable_mosaic.version = 11 : i64} {
  func.func @_predictor_kernel(%arg0: i32, %arg1: memref<8x32xf32, #tpu.memory_space<vmem>>, %arg2: memref<32x128xbf16, #tpu.memory_space<vmem>>, %arg3: memref<1x128xf32, #tpu.memory_space<vmem>>, %arg4: memref<1x128xf32, #tpu.memory_space<vmem>>, %arg5: memref<1x128xf32, #tpu.memory_space<vmem>>, %arg6: memref<128x128xbf16, #tpu.memory_space<vmem>>, %arg7: memref<1x128xf32, #tpu.memory_space<vmem>>, %arg8: memref<8x128xf32, #tpu.memory_space<vmem>>) attributes {dimension_semantics = [#tpu.dimension_semantics<parallel>], iteration_bounds = array<i64: 1>, scalar_prefetch = 0 : i64, scratch_operands = 0 : i64, tpu.core_type = #tpu.core_type<tc>, window_params = [{transform_indices = @transform_0, window_bounds = array<i64: 8, 32>}, {pipeline_mode = #tpu.pipeline_mode<synchronous>, transform_indices = @transform_1, window_bounds = array<i64: 32, 128>}, {pipeline_mode = #tpu.pipeline_mode<synchronous>, transform_indices = @transform_2, window_bounds = array<i64: 1, 128>}, {pipeline_mode = #tpu.pipeline_mode<synchronous>, transform_indices = @transform_3, window_bounds = array<i64: 1, 128>}, {pipeline_mode = #tpu.pipeline_mode<synchronous>, transform_indices = @transform_4, window_bounds = array<i64: 1, 128>}, {pipeline_mode = #tpu.pipeline_mode<synchronous>, transform_indices = @transform_5, window_bounds = array<i64: 128, 128>}, {pipeline_mode = #tpu.pipeline_mode<synchronous>, transform_indices = @transform_6, window_bounds = array<i64: 1, 128>}, {transform_indices = @transform_7, window_bounds = array<i64: 8, 128>}]} {
    %c0 = arith.constant 0 : index
    %c0_0 = arith.constant 0 : index
    %0 = vector.load %arg1[%c0, %c0_0] : memref<8x32xf32, #tpu.memory_space<vmem>>, vector<8x32xf32>
    %1 = arith.truncf %0 : vector<8x32xf32> to vector<8x32xbf16>
    %c0_1 = arith.constant 0 : index
    %c0_2 = arith.constant 0 : index
    %2 = vector.load %arg2[%c0_1, %c0_2] : memref<32x128xbf16, #tpu.memory_space<vmem>>, vector<32x128xbf16>
    %cst = arith.constant dense<0.000000e+00> : vector<8x128xf32>
    %3 = tpu.matmul %1, %2, %cst {dimension_numbers = #tpu.dot_dimension_numbers<[1], [0], [0], [1], [0, 0, 1, 1], [], []>} : vector<8x32xbf16>, vector<32x128xbf16>, vector<8x128xf32> -> vector<8x128xf32>
    %c0_3 = arith.constant 0 : index
    %c0_4 = arith.constant 0 : index
    %4 = vector.load %arg3[%c0_3, %c0_4] : memref<1x128xf32, #tpu.memory_space<vmem>>, vector<1x128xf32>
    %5 = vector.broadcast %4 : vector<1x128xf32> to vector<8x128xf32>
    %6 = arith.addf %3, %5 : vector<8x128xf32>
    %cst_5 = arith.constant dense<0.000000e+00> : vector<8xf32>
    %7 = vector.multi_reduction <add>, %6, %cst_5 [1] : vector<8x128xf32> to vector<8xf32>
    %8 = vector.shape_cast %7 : vector<8xf32> to vector<8x1xf32>
    %cst_6 = arith.constant 1.280000e+02 : f32
    %9 = vector.broadcast %cst_6 : f32 to vector<8x1xf32>
    %10 = arith.divf %8, %9 : vector<8x1xf32>
    %11 = vector.broadcast %10 : vector<8x1xf32> to vector<8x128xf32>
    %12 = arith.subf %6, %11 : vector<8x128xf32>
    %13 = vector.broadcast %10 : vector<8x1xf32> to vector<8x128xf32>
    %14 = arith.subf %6, %13 : vector<8x128xf32>
    %15 = arith.mulf %12, %14 : vector<8x128xf32>
    %cst_7 = arith.constant dense<0.000000e+00> : vector<8xf32>
    %16 = vector.multi_reduction <add>, %15, %cst_7 [1] : vector<8x128xf32> to vector<8xf32>
    %17 = vector.shape_cast %16 : vector<8xf32> to vector<8x1xf32>
    %cst_8 = arith.constant 1.280000e+02 : f32
    %18 = vector.broadcast %cst_8 : f32 to vector<8x1xf32>
    %19 = arith.divf %17, %18 : vector<8x1xf32>
    %20 = vector.broadcast %10 : vector<8x1xf32> to vector<8x128xf32>
    %21 = arith.subf %6, %20 : vector<8x128xf32>
    %cst_9 = arith.constant 9.99999974E-6 : f32
    %22 = vector.broadcast %cst_9 : f32 to vector<8x1xf32>
    %23 = arith.addf %19, %22 : vector<8x1xf32>
    %24 = math.rsqrt %23 : vector<8x1xf32>
    %25 = vector.broadcast %24 : vector<8x1xf32> to vector<8x128xf32>
    %26 = arith.mulf %21, %25 : vector<8x128xf32>
    %c0_10 = arith.constant 0 : index
    %c0_11 = arith.constant 0 : index
    %27 = vector.load %arg4[%c0_10, %c0_11] : memref<1x128xf32, #tpu.memory_space<vmem>>, vector<1x128xf32>
    %28 = vector.broadcast %27 : vector<1x128xf32> to vector<8x128xf32>
    %29 = arith.mulf %26, %28 : vector<8x128xf32>
    %c0_12 = arith.constant 0 : index
    %c0_13 = arith.constant 0 : index
    %30 = vector.load %arg5[%c0_12, %c0_13] : memref<1x128xf32, #tpu.memory_space<vmem>>, vector<1x128xf32>
    %31 = vector.broadcast %30 : vector<1x128xf32> to vector<8x128xf32>
    %32 = arith.addf %29, %31 : vector<8x128xf32>
    %cst_14 = arith.constant 0.000000e+00 : f32
    %33 = vector.broadcast %cst_14 : f32 to vector<8x128xf32>
    %34 = arith.maximumf %32, %33 : vector<8x128xf32>
    %35 = arith.truncf %34 : vector<8x128xf32> to vector<8x128xbf16>
    %c0_15 = arith.constant 0 : index
    %c0_16 = arith.constant 0 : index
    %36 = vector.load %arg6[%c0_15, %c0_16] : memref<128x128xbf16, #tpu.memory_space<vmem>>, vector<128x128xbf16>
    %cst_17 = arith.constant dense<0.000000e+00> : vector<8x128xf32>
    %37 = tpu.matmul %35, %36, %cst_17 {dimension_numbers = #tpu.dot_dimension_numbers<[1], [0], [0], [1], [0, 0, 1, 1], [], []>} : vector<8x128xbf16>, vector<128x128xbf16>, vector<8x128xf32> -> vector<8x128xf32>
    %c0_18 = arith.constant 0 : index
    %c0_19 = arith.constant 0 : index
    %38 = vector.load %arg7[%c0_18, %c0_19] : memref<1x128xf32, #tpu.memory_space<vmem>>, vector<1x128xf32>
    %39 = vector.broadcast %38 : vector<1x128xf32> to vector<8x128xf32>
    %40 = arith.addf %37, %39 : vector<8x128xf32>
    %cst_20 = arith.constant dense<0xFF800000> : vector<8xf32>
    %41 = vector.multi_reduction <maximumf>, %40, %cst_20 [1] : vector<8x128xf32> to vector<8xf32>
    %42 = vector.shape_cast %41 : vector<8xf32> to vector<8x1xf32>
    %43 = vector.broadcast %42 : vector<8x1xf32> to vector<8x128xf32>
    %44 = arith.subf %40, %43 : vector<8x128xf32>
    %45 = math.exp %44 : vector<8x128xf32>
    %cst_21 = arith.constant dense<0.000000e+00> : vector<8xf32>
    %46 = vector.multi_reduction <add>, %45, %cst_21 [1] : vector<8x128xf32> to vector<8xf32>
    %47 = vector.shape_cast %46 : vector<8xf32> to vector<8x1xf32>
    %48 = math.log %47 : vector<8x1xf32>
    %49 = arith.addf %42, %48 : vector<8x1xf32>
    %50 = vector.broadcast %49 : vector<8x1xf32> to vector<8x128xf32>
    %51 = arith.subf %40, %50 : vector<8x128xf32>
    %c0_22 = arith.constant 0 : index
    %c0_23 = arith.constant 0 : index
    %52 = vector.load %arg8[%c0_22, %c0_23] : memref<8x128xf32, #tpu.memory_space<vmem>>, vector<8x128xf32>
    tpu.vector_store %arg8[%c0_22, %c0_23], %51 {strides = array<i32>} : memref<8x128xf32, #tpu.memory_space<vmem>>, vector<8x128xf32>,
    return
  }
  func.func @transform_0(%arg0: i32) -> (i32, i32) {
    %c0_i32 = arith.constant 0 : i32
    %c0_i32_0 = arith.constant 0 : i32
    return %arg0, %c0_i32 : i32, i32
  }
  func.func @transform_1(%arg0: i32) -> (i32, i32) {
    %c0_i32 = arith.constant 0 : i32
    %c0_i32_0 = arith.constant 0 : i32
    %c0_i32_1 = arith.constant 0 : i32
    return %c0_i32, %c0_i32_0 : i32, i32
  }
  func.func @transform_2(%arg0: i32) -> (i32, i32) {
    %c0_i32 = arith.constant 0 : i32
    %c0_i32_0 = arith.constant 0 : i32
    %c0_i32_1 = arith.constant 0 : i32
    return %c0_i32, %c0_i32_0 : i32, i32
  }
  func.func @transform_3(%arg0: i32) -> (i32, i32) {
    %c0_i32 = arith.constant 0 : i32
    %c0_i32_0 = arith.constant 0 : i32
    %c0_i32_1 = arith.constant 0 : i32
    return %c0_i32, %c0_i32_0 : i32, i32
  }
  func.func @transform_4(%arg0: i32) -> (i32, i32) {
    %c0_i32 = arith.constant 0 : i32
    %c0_i32_0 = arith.constant 0 : i32
    %c0_i32_1 = arith.constant 0 : i32
    return %c0_i32, %c0_i32_0 : i32, i32
  }
  func.func @transform_5(%arg0: i32) -> (i32, i32) {
    %c0_i32 = arith.constant 0 : i32
    %c0_i32_0 = arith.constant 0 : i32
    %c0_i32_1 = arith.constant 0 : i32
    return %c0_i32, %c0_i32_0 : i32, i32
  }
  func.func @transform_6(%arg0: i32) -> (i32, i32) {
    %c0_i32 = arith.constant 0 : i32
    %c0_i32_0 = arith.constant 0 : i32
    %c0_i32_1 = arith.constant 0 : i32
    return %c0_i32, %c0_i32_0 : i32, i32
  }
  func.func @transform_7(%arg0: i32) -> (i32, i32) {
    %c0_i32 = arith.constant 0 : i32
    %c0_i32_0 = arith.constant 0 : i32
    return %arg0, %c0_i32 : i32, i32
  }
}

module attributes {stable_mosaic.version = 11 : i64} {
  func.func @_predictor_kernel(%arg0: i32, %arg1: memref<8x32xf32, #tpu.memory_space<vmem>>, %arg2: memref<32x128xbf16, #tpu.memory_space<vmem>>, %arg3: memref<1x128xf32, #tpu.memory_space<vmem>>, %arg4: memref<1x128xf32, #tpu.memory_space<vmem>>, %arg5: memref<1x128xf32, #tpu.memory_space<vmem>>, %arg6: memref<128x128xbf16, #tpu.memory_space<vmem>>, %arg7: memref<1x128xf32, #tpu.memory_space<vmem>>, %arg8: memref<8x128xf32, #tpu.memory_space<vmem>>) attributes {dimension_semantics = [#tpu.dimension_semantics<parallel>], iteration_bounds = array<i64: 1>, scalar_prefetch = 0 : i64, scratch_operands = 0 : i64, tpu.core_type = #tpu.core_type<tc>, window_params = [{transform_indices = @transform_0, window_bounds = array<i64: 8, 32>}, {pipeline_mode = #tpu.pipeline_mode<synchronous>, transform_indices = @transform_1, window_bounds = array<i64: 32, 128>}, {pipeline_mode = #tpu.pipeline_mode<synchronous>, transform_indices = @transform_2, window_bounds = array<i64: 1, 128>}, {pipeline_mode = #tpu.pipeline_mode<synchronous>, transform_indices = @transform_3, window_bounds = array<i64: 1, 128>}, {pipeline_mode = #tpu.pipeline_mode<synchronous>, transform_indices = @transform_4, window_bounds = array<i64: 1, 128>}, {pipeline_mode = #tpu.pipeline_mode<synchronous>, transform_indices = @transform_5, window_bounds = array<i64: 128, 128>}, {pipeline_mode = #tpu.pipeline_mode<synchronous>, transform_indices = @transform_6, window_bounds = array<i64: 1, 128>}, {transform_indices = @transform_7, window_bounds = array<i64: 8, 128>}]} {
    %c0 = arith.constant 0 : index
    %c0_0 = arith.constant 0 : index
    %0 = vector.load %arg1[%c0, %c0_0] : memref<8x32xf32, #tpu.memory_space<vmem>>, vector<8x32xf32>
    %1 = arith.truncf %0 : vector<8x32xf32> to vector<8x32xbf16>
    %c0_1 = arith.constant 0 : index
    %c0_2 = arith.constant 0 : index
    %2 = vector.load %arg2[%c0_1, %c0_2] : memref<32x128xbf16, #tpu.memory_space<vmem>>, vector<32x128xbf16>
    %cst = arith.constant dense<0.000000e+00> : vector<8x128xf32>
    %3 = tpu.matmul %1, %2, %cst {dimension_numbers = #tpu.dot_dimension_numbers<[1], [0], [0], [1], [0, 0, 1, 1], [], []>} : vector<8x32xbf16>, vector<32x128xbf16>, vector<8x128xf32> -> vector<8x128xf32>
    %c0_3 = arith.constant 0 : index
    %c0_4 = arith.constant 0 : index
    %4 = vector.load %arg3[%c0_3, %c0_4] : memref<1x128xf32, #tpu.memory_space<vmem>>, vector<1x128xf32>
    %5 = vector.broadcast %4 : vector<1x128xf32> to vector<8x128xf32>
    %6 = arith.addf %3, %5 : vector<8x128xf32>
    %cst_5 = arith.constant dense<0.000000e+00> : vector<8xf32>
    %7 = vector.multi_reduction <add>, %6, %cst_5 [1] : vector<8x128xf32> to vector<8xf32>
    %8 = vector.shape_cast %7 : vector<8xf32> to vector<8x1xf32>
    %cst_6 = arith.constant 1.280000e+02 : f32
    %9 = vector.broadcast %cst_6 : f32 to vector<8x1xf32>
    %10 = arith.divf %8, %9 : vector<8x1xf32>
    %11 = vector.broadcast %10 : vector<8x1xf32> to vector<8x128xf32>
    %12 = arith.subf %6, %11 : vector<8x128xf32>
    %13 = vector.broadcast %10 : vector<8x1xf32> to vector<8x128xf32>
    %14 = arith.subf %6, %13 : vector<8x128xf32>
    %15 = arith.mulf %12, %14 : vector<8x128xf32>
    %cst_7 = arith.constant dense<0.000000e+00> : vector<8xf32>
    %16 = vector.multi_reduction <add>, %15, %cst_7 [1] : vector<8x128xf32> to vector<8xf32>
    %17 = vector.shape_cast %16 : vector<8xf32> to vector<8x1xf32>
    %cst_8 = arith.constant 1.280000e+02 : f32
    %18 = vector.broadcast %cst_8 : f32 to vector<8x1xf32>
    %19 = arith.divf %17, %18 : vector<8x1xf32>
    %20 = vector.broadcast %10 : vector<8x1xf32> to vector<8x128xf32>
    %21 = arith.subf %6, %20 : vector<8x128xf32>
    %cst_9 = arith.constant 9.99999974E-6 : f32
    %22 = vector.broadcast %cst_9 : f32 to vector<8x1xf32>
    %23 = arith.addf %19, %22 : vector<8x1xf32>
    %24 = math.rsqrt %23 : vector<8x1xf32>
    %25 = vector.broadcast %24 : vector<8x1xf32> to vector<8x128xf32>
    %26 = arith.mulf %21, %25 : vector<8x128xf32>
    %c0_10 = arith.constant 0 : index
    %c0_11 = arith.constant 0 : index
    %27 = vector.load %arg4[%c0_10, %c0_11] : memref<1x128xf32, #tpu.memory_space<vmem>>, vector<1x128xf32>
    %28 = vector.broadcast %27 : vector<1x128xf32> to vector<8x128xf32>
    %29 = arith.mulf %26, %28 : vector<8x128xf32>
    %c0_12 = arith.constant 0 : index
    %c0_13 = arith.constant 0 : index
    %30 = vector.load %arg5[%c0_12, %c0_13] : memref<1x128xf32, #tpu.memory_space<vmem>>, vector<1x128xf32>
    %31 = vector.broadcast %30 : vector<1x128xf32> to vector<8x128xf32>
    %32 = arith.addf %29, %31 : vector<8x128xf32>
    %cst_14 = arith.constant 0.000000e+00 : f32
    %33 = vector.broadcast %cst_14 : f32 to vector<8x128xf32>
    %34 = arith.maximumf %32, %33 : vector<8x128xf32>
    %35 = arith.truncf %34 : vector<8x128xf32> to vector<8x128xbf16>
    %c0_15 = arith.constant 0 : index
    %c0_16 = arith.constant 0 : index
    %36 = vector.load %arg6[%c0_15, %c0_16] : memref<128x128xbf16, #tpu.memory_space<vmem>>, vector<128x128xbf16>
    %cst_17 = arith.constant dense<0.000000e+00> : vector<8x128xf32>
    %37 = tpu.matmul %35, %36, %cst_17 {dimension_numbers = #tpu.dot_dimension_numbers<[1], [0], [0], [1], [0, 0, 1, 1], [], []>} : vector<8x128xbf16>, vector<128x128xbf16>, vector<8x128xf32> -> vector<8x128xf32>
    %c0_18 = arith.constant 0 : index
    %c0_19 = arith.constant 0 : index
    %38 = vector.load %arg7[%c0_18, %c0_19] : memref<1x128xf32, #tpu.memory_space<vmem>>, vector<1x128xf32>
    %39 = vector.broadcast %38 : vector<1x128xf32> to vector<8x128xf32>
    %40 = arith.addf %37, %39 : vector<8x128xf32>
    %cst_20 = arith.constant dense<0xFF800000> : vector<8xf32>
    %41 = vector.multi_reduction <maximumf>, %40, %cst_20 [1] : vector<8x128xf32> to vector<8xf32>
    %42 = vector.shape_cast %41 : vector<8xf32> to vector<8x1xf32>
    %43 = vector.broadcast %42 : vector<8x1xf32> to vector<8x128xf32>
    %44 = arith.subf %40, %43 : vector<8x128xf32>
    %45 = math.exp %44 : vector<8x128xf32>
    %cst_21 = arith.constant dense<0.000000e+00> : vector<8xf32>
    %46 = vector.multi_reduction <add>, %45, %cst_21 [1] : vector<8x128xf32> to vector<8xf32>
    %47 = vector.shape_cast %46 : vector<8xf32> to vector<8x1xf32>
    %48 = math.log %47 : vector<8x1xf32>
    %49 = arith.addf %42, %48 : vector<8x1xf32>
    %50 = vector.broadcast %49 : vector<8x1xf32> to vector<8x128xf32>
    %51 = arith.subf %40, %50 : vector<8x128xf32>
    %c0_22 = arith.constant 0 : index
    %c0_23 = arith.constant 0 : index
    %52 = vector.load %arg8[%c0_22, %c0_23] : memref<8x128xf32, #tpu.memory_space<vmem>>, vector<8x128xf32>
    tpu.vector_store %arg8[%c0_22, %c0_23], %51 {strides = array<i32>} : memref<8x128xf32, #tpu.memory_space<vmem>>, vector<8x128xf32>,
    return
  }
  func.func @transform_0(%arg0: i32) -> (i32, i32) {
    %c0_i32 = arith.constant 0 : i32
    %c0_i32_0 = arith.constant 0 : i32
    return %arg0, %c0_i32 : i32, i32
  }
  func.func @transform_1(%arg0: i32) -> (i32, i32) {
    %c0_i32 = arith.constant 0 : i32
    %c0_i32_0 = arith.constant 0 : i32
    %c0_i32_1 = arith.constant 0 : i32
    return %c0_i32, %c0_i32_0 : i32, i32
  }
  func.func @transform_2(%arg0: i32) -> (i32, i32) {
    %c0_i32 = arith.constant 0 : i32
    %c0_i32_0 = arith.constant 0 : i32
    %c0_i32_1 = arith.constant 0 : i32
    return %c0_i32, %c0_i32_0 : i32, i32
  }
  func.func @transform_3(%arg0: i32) -> (i32, i32) {
    %c0_i32 = arith.constant 0 : i32
    %c0_i32_0 = arith.constant 0 : i32
    %c0_i32_1 = arith.constant 0 : i32
    return %c0_i32, %c0_i32_0 : i32, i32
  }
  func.func @transform_4(%arg0: i32) -> (i32, i32) {
    %c0_i32 = arith.constant 0 : i32
    %c0_i32_0 = arith.constant 0 : i32
    %c0_i32_1 = arith.constant 0 : i32
    return %c0_i32, %c0_i32_0 : i32, i32
  }
  func.func @transform_5(%arg0: i32) -> (i32, i32) {
    %c0_i32 = arith.constant 0 : i32
    %c0_i32_0 = arith.constant 0 : i32
    %c0_i32_1 = arith.constant 0 : i32
    return %c0_i32, %c0_i32_0 : i32, i32
  }
  func.func @transform_6(%arg0: i32) -> (i32, i32) {
    %c0_i32 = arith.constant 0 : i32
    %c0_i32_0 = arith.constant 0 : i32
    %c0_i32_1 = arith.constant 0 : i32
    return %c0_i32, %c0_i32_0 : i32, i32
  }
  func.func @transform_7(%arg0: i32) -> (i32, i32) {
    %c0_i32 = arith.constant 0 : i32
    %c0_i32_0 = arith.constant 0 : i32
    return %arg0, %c0_i32 : i32, i32
  }
}

</mosaic_0001>

<llo_original>
// kernel: tpu_custom_call.1
$region0: #{tpu_custom_call.1}
  #allocation0 [shape = 'u32[]', space=smem, size = 0x4, offset = 0x4, fixed_abs, tag = 'smem constant byte address 0x4 - core index']
  #allocation1 [shape = 'u32[144,128]{1,0:T(1,128)}', space=vmem, size = 0x12000, scoped, tag = 'internal scratch']
  %s0 = inlined_call_operand.hbm [shape: f32[8,32], index: 0, kind: input, shape index: {}]
  %s1 = inlined_call_operand.hbm [shape: bf16[32,128], index: 1, kind: input, shape index: {}]
  %s2 = inlined_call_operand.vmem [shape: f32[1,128], index: 2, kind: input, shape index: {}]
  %s3 = inlined_call_operand.vmem [shape: f32[1,128], index: 3, kind: input, shape index: {}]
  %s4 = inlined_call_operand.vmem [shape: f32[1,128], index: 4, kind: input, shape index: {}]
  %s5 = inlined_call_operand.hbm [shape: bf16[128,128], index: 5, kind: input, shape index: {}]
  %s6 = inlined_call_operand.vmem [shape: f32[1,128], index: 6, kind: input, shape index: {}]
  %s7 = inlined_call_operand.hbm [shape: f32[8,128], index: 7, kind: output, shape index: {}]
  %s8 = sld [smem:[#allocation0]]
  $region50: #{tpu_custom_call.1} parent=0
    _
  %s10 = ssub.s32 1, %s8
  %s11 = scalar_select 0, %s10, %s8
  $region1: #{tpu_custom_call.1} parent=0
    #allocation2 [shape = 'u8[4096]{0}', space=vmem, size = 0x1000, scoped, tag = 'input window, operand 0, single buffered']
    #allocation3 [shape = 's32[1]{0}', space=sflag, size = 0x4, scoped, tag = 'scoped memory for tpu_custom_call.1']
    #allocation4 [shape = 's32[1]{0}', space=sflag, size = 0x4, scoped, tag = 'scoped memory for tpu_custom_call.1']
    #allocation5 [shape = 'u8[8192]{0}', space=vmem, size = 0x2000, scoped, tag = 'input window, operand 1, single buffered']
    #allocation6 [shape = 's32[1]{0}', space=sflag, size = 0x4, scoped, tag = 'scoped memory for tpu_custom_call.1']
    #allocation7 [shape = 'u8[32768]{0}', space=vmem, size = 0x8000, scoped, tag = 'input window, operand 5, single buffered']
    #allocation8 [shape = 'u8[4096]{0}', space=vmem, size = 0x1000, scoped, tag = 'output window, operand 0, single buffered']
    %12 = vsyncpa [#allocation3], 0
    %13 = vsyncpa [#allocation6], 0
    %14 = vsyncpa [#allocation4], 0
    // Predicated region
    $region2: #{tpu_custom_call.1} parent=1 // pred_check
      _
    $region3: #{tpu_custom_call.1} parent=1 // pred_check_branch
      %16 = sbr.rel (0) target = $region5
    $region4: #{tpu_custom_call.1} parent=1 // pred_region
      %s18 = ssub.s32 128, 128
      %19 = vsyncadd [#allocation3], %s18
      %s21 = sshll.u32 [#allocation2], 4
      %s22 = int_to_ptr.vmem [resolvable:$true] %s21
      %24 = dma.hbm_to_vmem [thread:$0]  %s0, 128, %s22, [#allocation3]
    $region5: #{tpu_custom_call.1} parent=1 // pred_fallthru
      _
    // Predicated region
    $region6: #{tpu_custom_call.1} parent=1 // pred_check
      _
    $region7: #{tpu_custom_call.1} parent=1 // pred_check_branch
      %26 = sbr.rel (0) target = $region9
    $region8: #{tpu_custom_call.1} parent=1 // pred_region
      %s28 = ssub.s32 256, 256
      %29 = vsyncadd [#allocation6], %s28
      %s30 = sshll.u32 [#allocation5], 4
      %s31 = int_to_ptr.vmem [resolvable:$true] %s30
      %36 = dma.hbm_to_vmem [thread:$0]  %s1, 256, %s31, [#allocation6], 64, 64, 4
    $region9: #{tpu_custom_call.1} parent=1 // pred_fallthru
      _
    // Predicated region
    $region10: #{tpu_custom_call.1} parent=1 // pred_check
      _
    $region11: #{tpu_custom_call.1} parent=1 // pred_check_branch
      %38 = sbr.rel (0) target = $region13
    $region12: #{tpu_custom_call.1} parent=1 // pred_region
      _
    $region13: #{tpu_custom_call.1} parent=1 // pred_fallthru
      _
    // Predicated region
    $region14: #{tpu_custom_call.1} parent=1 // pred_check
      _
    $region15: #{tpu_custom_call.1} parent=1 // pred_check_branch
      %40 = sbr.rel (0) target = $region17
    $region16: #{tpu_custom_call.1} parent=1 // pred_region
      _
    $region17: #{tpu_custom_call.1} parent=1 // pred_fallthru
      _
    // Predicated region
    $region18: #{tpu_custom_call.1} parent=1 // pred_check
      _
    $region19: #{tpu_custom_call.1} parent=1 // pred_check_branch
      %42 = sbr.rel (0) target = $region21
    $region20: #{tpu_custom_call.1} parent=1 // pred_region
      _
    $region21: #{tpu_custom_call.1} parent=1 // pred_fallthru
      _
    // Predicated region
    $region22: #{tpu_custom_call.1} parent=1 // pred_check
      _
    $region23: #{tpu_custom_call.1} parent=1 // pred_check_branch
      %44 = sbr.rel (0) target = $region25
    $region24: #{tpu_custom_call.1} parent=1 // pred_region
      %s46 = ssub.s32 1024, 1024
      %47 = vsyncadd [#allocation6], %s46
      %s48 = sshll.u32 [#allocation7], 4
      %s49 = int_to_ptr.vmem [resolvable:$true] %s48
      %54 = dma.hbm_to_vmem [thread:$0]  %s5, 1024, %s49, [#allocation6], 64, 64, 4
    $region25: #{tpu_custom_call.1} parent=1 // pred_fallthru
      _
    // Predicated region
    $region26: #{tpu_custom_call.1} parent=1 // pred_check
      _
    $region27: #{tpu_custom_call.1} parent=1 // pred_check_branch
      %56 = sbr.rel (0) target = $region29
    $region28: #{tpu_custom_call.1} parent=1 // pred_region
      _
    $region29: #{tpu_custom_call.1} parent=1 // pred_fallthru
      _
    // Predicated region
    $region30: #{tpu_custom_call.1} parent=1 // pred_check
      _
    $region31: #{tpu_custom_call.1} parent=1 // pred_check_branch
      %58 = sbr.rel (0) target = $region33
    $region32: #{tpu_custom_call.1} parent=1 // pred_region
      %59 = dma.done [#allocation3], 128
    $region33: #{tpu_custom_call.1} parent=1 // pred_fallthru
      _
    // Predicated region
    $region34: #{tpu_custom_call.1} parent=1 // pred_check
      _
    $region35: #{tpu_custom_call.1} parent=1 // pred_check_branch
      %61 = sbr.rel (0) target = $region37
    $region36: #{tpu_custom_call.1} parent=1 // pred_region
      %62 = dma.done [#allocation6], 256
    $region37: #{tpu_custom_call.1} parent=1 // pred_fallthru
      _
    // Predicated region
    $region38: #{tpu_custom_call.1} parent=1 // pred_check
      _
    $region39: #{tpu_custom_call.1} parent=1 // pred_check_branch
      %64 = sbr.rel (0) target = $region41
    $region40: #{tpu_custom_call.1} parent=1 // pred_region
      %65 = dma.done [#allocation6], 1024
    $region41: #{tpu_custom_call.1} parent=1 // pred_fallthru
      _
    %v67 = vld [vmem:[#allocation2] sm:$0xff]
    %v68 = vpack.c.bf16 %v67, %v67
    %v69 = vld [vmem:[#allocation5] sm:$0xf]
    %v70 = vld [vmem:[#allocation5 + $0x4] sm:$0xf]
    %v71 = vld [vmem:[#allocation5 + $0x8] sm:$0xf]
    %v72 = vld [vmem:[#allocation5 + $0xc] sm:$0xf]
    %v73 = vld [vmem:[%s2] sm:$0x1]
    %v75 = vlaneseq
    %v76 = vshrl.u32 %v75, 7
    %v77 = vsub.s32 0, %v76
    %v78 = vrot.slane %v73, %v77
    %v84 = vunpack.c.l.b16 %v69
    %v85 = vunpack.c.l.b16 %v70
    %v86 = vunpack.c.l.b16 %v71
    %v87 = vunpack.c.l.b16 %v72
    %v88 = vpack.c.b16 %v85, %v84
    %v89 = vpack.c.b16 %v87, %v86
    %vm92 = vcmask 261120
    %v94 = vsel %vm92, %v68, 0
    %96 = vmatprep.subr.bf16.mxu0 0
    %97 = vmatpush1.bf16.msra.mxu0 %v88
    %98 = vmatprep.subr.bf16.mxu0 0
    %99 = vmatpush1.bf16.msra.mxu0 %v89
    %100 = vmatprep.subr.bf16.mxu0 0
    %101 = vmatpush1.bf16.msra.mxu0 0
    %102 = vmatprep.subr.bf16.mxu0 0
    %103 = vmatpush1.bf16.msra.mxu0 0
    %104 = vmatprep.subr.bf16.mxu0 0
    %105 = vmatpush1.bf16.msra.mxu0 0
    %106 = vmatprep.subr.bf16.mxu0 0
    %107 = vmatpush1.bf16.msra.mxu0 0
    %108 = vmatprep.subr.bf16.mxu0 0
    %109 = vmatpush1.bf16.msra.mxu0 0
    %110 = vmatprep.subr.bf16.mxu0 0
    %111 = vmatpush1.bf16.msra.mxu0 0
    %112 = vmatprep.subr.bf16.mxu0 0
    %113 = vmatpush1.bf16.msra.mxu0 0
    %114 = vmatprep.subr.bf16.mxu0 0
    %115 = vmatpush1.bf16.msra.mxu0 0
    %116 = vmatprep.subr.bf16.mxu0 0
    %117 = vmatpush1.bf16.msra.mxu0 0
    %118 = vmatprep.subr.bf16.mxu0 0
    %119 = vmatpush1.bf16.msra.mxu0 0
    %120 = vmatprep.subr.bf16.mxu0 0
    %121 = vmatpush1.bf16.msra.mxu0 0
    %122 = vmatprep.subr.bf16.mxu0 0
    %123 = vmatpush1.bf16.msra.mxu0 0
    %124 = vmatprep.subr.bf16.mxu0 0
    %125 = vmatpush1.bf16.msra.mxu0 0
    %126 = vmatprep.subr.bf16.mxu0 0
    %127 = vmatpush1.bf16.msra.mxu0 0
    %128 = vmatprep.mubr.bf16.mxu0 0
    %129 = vmatmul.mubr.bf16.gmra.mrb[0].mxu0 %v94
    %v130 = vpop.f32.mrb[0].mxu0
    %v131 = vadd.f32 %v78, %v130
    %v132 = vpop.f32.mrb[0].mxu0
    %v133 = vpop.f32.mrb[0].mxu0
    %v134 = vpop.f32.mrb[0].mxu0
    %135 = vdwg.mxu0
    %136 = vadd.xlane.f32.xlu0 %v131
    %v137 = vpop.xlane.xlu0 %136
    %v138 = vrcp.pop 128.0
    %v139 = vmul.f32 %v137, %v138
    %v140 = vsub.f32 %v131, %v139
    %v141 = vmul.f32 %v140, %v140
    %142 = vadd.xlane.f32.xlu0 %v141
    %v143 = vpop.xlane.xlu0 %142
    %v144 = vmul.f32 %v143, %v138
    %v145 = vadd.f32 %v144, 1e-05
    %v146 = vrsqrt.pop %v145
    %v147 = vmul.f32 %v140, %v146
    %v148 = vld [vmem:[%s3] sm:$0x1]
    %v150 = vlaneseq
    %v151 = vshrl.u32 %v150, 7
    %v152 = vsub.s32 0, %v151
    %v153 = vrot.slane %v148, %v152
    %v155 = vmul.f32 %v147, %v153
    %v156 = vld [vmem:[%s4] sm:$0x1]
    %v158 = vlaneseq
    %v159 = vshrl.u32 %v158, 7
    %v160 = vsub.s32 0, %v159
    %v161 = vrot.slane %v156, %v160
    %v163 = vadd.f32 %v155, %v161
    %v164 = vmax.f32 %v163, 0.0
    %v165 = vpack.c.bf16 %v164, %v164
    %v166 = vld [vmem:[#allocation7] sm:$0xf]
    %v167 = vld [vmem:[#allocation7 + $0x4] sm:$0xf]
    %v168 = vld [vmem:[#allocation7 + $0x8] sm:$0xf]
    %v169 = vld [vmem:[#allocation7 + $0xc] sm:$0xf]
    %v170 = vld [vmem:[#allocation7 + $0x10] sm:$0xf]
    %v171 = vld [vmem:[#allocation7 + $0x14] sm:$0xf]
    %v172 = vld [vmem:[#allocation7 + $0x18] sm:$0xf]
    %v173 = vld [vmem:[#allocation7 + $0x1c] sm:$0xf]
    %v174 = vld [vmem:[#allocation7 + $0x20] sm:$0xf]
    %v175 = vld [vmem:[#allocation7 + $0x24] sm:$0xf]
    %v176 = vld [vmem:[#allocation7 + $0x28] sm:$0xf]
    %v177 = vld [vmem:[#allocation7 + $0x2c] sm:$0xf]
    %v178 = vld [vmem:[#allocation7 + $0x30] sm:$0xf]
    %v179 = vld [vmem:[#allocation7 + $0x34] sm:$0xf]
    %v180 = vld [vmem:[#allocation7 + $0x38] sm:$0xf]
    %v181 = vld [vmem:[#allocation7 + $0x3c] sm:$0xf]
    %v182 = vld [vmem:[%s6] sm:$0x1]
    %v184 = vlaneseq
    %v185 = vshrl.u32 %v184, 7
    %v186 = vsub.s32 0, %v185
    %v187 = vrot.slane %v182, %v186
    %v205 = vunpack.c.l.b16 %v166
    %v206 = vunpack.c.l.b16 %v167
    %v207 = vunpack.c.l.b16 %v168
    %v208 = vunpack.c.l.b16 %v169
    %v209 = vunpack.c.l.b16 %v170
    %v210 = vunpack.c.l.b16 %v171
    %v211 = vunpack.c.l.b16 %v172
    %v212 = vunpack.c.l.b16 %v173
    %v213 = vunpack.c.l.b16 %v174
    %v214 = vunpack.c.l.b16 %v175
    %v215 = vunpack.c.l.b16 %v176
    %v216 = vunpack.c.l.b16 %v177
    %v217 = vunpack.c.l.b16 %v178
    %v218 = vunpack.c.l.b16 %v179
    %v219 = vunpack.c.l.b16 %v180
    %v220 = vunpack.c.l.b16 %v181
    %v221 = vpack.c.b16 %v206, %v205
    %v222 = vpack.c.b16 %v208, %v207
    %v223 = vpack.c.b16 %v210, %v209
    %v224 = vpack.c.b16 %v212, %v211
    %v225 = vpack.c.b16 %v214, %v213
    %v226 = vpack.c.b16 %v216, %v215
    %v227 = vpack.c.b16 %v218, %v217
    %v228 = vpack.c.b16 %v220, %v219
    %237 = vmatprep.subr.bf16.mxu0 0
    %238 = vmatpush1.bf16.msra.mxu0 %v221
    %239 = vmatprep.subr.bf16.mxu0 0
    %240 = vmatpush1.bf16.msra.mxu0 %v222
    %241 = vmatprep.subr.bf16.mxu0 0
    %242 = vmatpush1.bf16.msra.mxu0 %v223
    %243 = vmatprep.subr.bf16.mxu0 0
    %244 = vmatpush1.bf16.msra.mxu0 %v224
    %245 = vmatprep.subr.bf16.mxu0 0
    %246 = vmatpush1.bf16.msra.mxu0 %v225
    %247 = vmatprep.subr.bf16.mxu0 0
    %248 = vmatpush1.bf16.msra.mxu0 %v226
    %249 = vmatprep.subr.bf16.mxu0 0
    %250 = vmatpush1.bf16.msra.mxu0 %v227
    %251 = vmatprep.subr.bf16.mxu0 0
    %252 = vmatpush1.bf16.msra.mxu0 %v228
    %253 = vmatprep.subr.bf16.mxu0 0
    %254 = vmatpush1.bf16.msra.mxu0 0
    %255 = vmatprep.subr.bf16.mxu0 0
    %256 = vmatpush1.bf16.msra.mxu0 0
    %257 = vmatprep.subr.bf16.mxu0 0
    %258 = vmatpush1.bf16.msra.mxu0 0
    %259 = vmatprep.subr.bf16.mxu0 0
    %260 = vmatpush1.bf16.msra.mxu0 0
    %261 = vmatprep.subr.bf16.mxu0 0
    %262 = vmatpush1.bf16.msra.mxu0 0
    %263 = vmatprep.subr.bf16.mxu0 0
    %264 = vmatpush1.bf16.msra.mxu0 0
    %265 = vmatprep.subr.bf16.mxu0 0
    %266 = vmatpush1.bf16.msra.mxu0 0
    %267 = vmatprep.subr.bf16.mxu0 0
    %268 = vmatpush1.bf16.msra.mxu0 0
    %269 = vmatprep.mubr.bf16.mxu0 0
    %270 = vmatmul.mubr.bf16.gmra.mrb[0].mxu0 %v165
    %v271 = vpop.f32.mrb[0].mxu0
    %v272 = vadd.f32 %v187, %v271
    %v273 = vpop.f32.mrb[0].mxu0
    %v274 = vpop.f32.mrb[0].mxu0
    %v275 = vpop.f32.mrb[0].mxu0
    %276 = vdwg.mxu0
    %277 = vmax.xlane.f32.xlu0 %v272
    %v278 = vpop.xlane.xlu0 %277
    %v279 = vsub.f32 %v272, %v278
    %v280 = vmul.f32 %v279, 1.442695
    %v281 = vpow.pop %v280
    %282 = vadd.xlane.f32.xlu0 %v281
    %v283 = vpop.xlane.xlu0 %282
    %v284 = vlog2.pop %v283
    %v285 = vmul.f32 %v284, 0.6931472
    %v286 = vadd.f32 %v278, %v285
    %v287 = vsub.f32 %v272, %v286
    %288 = vst [vmem:[#allocation8] sm:$0xff] %v287
    // Predicated region
    $region42: #{tpu_custom_call.1} parent=1 // pred_check
      _
    $region43: #{tpu_custom_call.1} parent=1 // pred_check_branch
      %290 = sbr.rel (0) target = $region45
    $region44: #{tpu_custom_call.1} parent=1 // pred_region
      %s292 = ssub.s32 128, 128
      %293 = vsyncadd [#allocation4], %s292
      %s295 = sshll.u32 [#allocation8], 4
      %s296 = int_to_ptr.vmem [resolvable:$true] %s295
      %298 = dma.vmem_to_hbm [thread:$0]  %s296, 128, %s7, [#allocation4]
    $region45: #{tpu_custom_call.1} parent=1 // pred_fallthru
      _
    // Predicated region
    $region46: #{tpu_custom_call.1} parent=1 // pred_check
      _
    $region47: #{tpu_custom_call.1} parent=1 // pred_check_branch
      %300 = sbr.rel (0) target = $region49
    $region48: #{tpu_custom_call.1} parent=1 // pred_region
      %301 = dma.done [#allocation4], 128
    $region49: #{tpu_custom_call.1} parent=1 // pred_fallthru
      _
    %302 = vsyncpa [#allocation3], 1
    %303 = vsyncpa [#allocation6], 1
    %304 = vsyncpa [#allocation4], 1

// kernel: tpu_custom_call.1
$region0: #{tpu_custom_call.1}
  #allocation0 [shape = 'u32[]', space=smem, size = 0x4, offset = 0x4, fixed_abs, tag = 'smem constant byte address 0x4 - core index']
  #allocation1 [shape = 'u32[144,128]{1,0:T(1,128)}', space=vmem, size = 0x12000, scoped, tag = 'internal scratch']
  %s0 = inlined_call_operand.hbm [shape: f32[8,32], index: 0, kind: input, shape index: {}]
  %s1 = inlined_call_operand.hbm [shape: bf16[32,128], index: 1, kind: input, shape index: {}]
  %s2 = inlined_call_operand.vmem [shape: f32[1,128], index: 2, kind: input, shape index: {}]
  %s3 = inlined_call_operand.vmem [shape: f32[1,128], index: 3, kind: input, shape index: {}]
  %s4 = inlined_call_operand.vmem [shape: f32[1,128], index: 4, kind: input, shape index: {}]
  %s5 = inlined_call_operand.hbm [shape: bf16[128,128], index: 5, kind: input, shape index: {}]
  %s6 = inlined_call_operand.vmem [shape: f32[1,128], index: 6, kind: input, shape index: {}]
  %s7 = inlined_call_operand.hbm [shape: f32[8,128], index: 7, kind: output, shape index: {}]
  %s8 = sld [smem:[#allocation0]]
  $region50: #{tpu_custom_call.1} parent=0
    _
  %s10 = ssub.s32 1, %s8
  %s11 = scalar_select 0, %s10, %s8
  $region1: #{tpu_custom_call.1} parent=0
    #allocation2 [shape = 'u8[4096]{0}', space=vmem, size = 0x1000, scoped, tag = 'input window, operand 0, single buffered']
    #allocation3 [shape = 's32[1]{0}', space=sflag, size = 0x4, scoped, tag = 'scoped memory for tpu_custom_call.1']
    #allocation4 [shape = 's32[1]{0}', space=sflag, size = 0x4, scoped, tag = 'scoped memory for tpu_custom_call.1']
    #allocation5 [shape = 'u8[8192]{0}', space=vmem, size = 0x2000, scoped, tag = 'input window, operand 1, single buffered']
    #allocation6 [shape = 's32[1]{0}', space=sflag, size = 0x4, scoped, tag = 'scoped memory for tpu_custom_call.1']
    #allocation7 [shape = 'u8[32768]{0}', space=vmem, size = 0x8000, scoped, tag = 'input window, operand 5, single buffered']
    #allocation8 [shape = 'u8[4096]{0}', space=vmem, size = 0x1000, scoped, tag = 'output window, operand 0, single buffered']
    %12 = vsyncpa [#allocation3], 0
    %13 = vsyncpa [#allocation6], 0
    %14 = vsyncpa [#allocation4], 0
    // Predicated region
    $region2: #{tpu_custom_call.1} parent=1 // pred_check
      _
    $region3: #{tpu_custom_call.1} parent=1 // pred_check_branch
      %16 = sbr.rel (0) target = $region5
    $region4: #{tpu_custom_call.1} parent=1 // pred_region
      %s18 = ssub.s32 128, 128
      %19 = vsyncadd [#allocation3], %s18
      %s21 = sshll.u32 [#allocation2], 4
      %s22 = int_to_ptr.vmem [resolvable:$true] %s21
      %24 = dma.hbm_to_vmem [thread:$0]  %s0, 128, %s22, [#allocation3]
    $region5: #{tpu_custom_call.1} parent=1 // pred_fallthru
      _
    // Predicated region
    $region6: #{tpu_custom_call.1} parent=1 // pred_check
      _
    $region7: #{tpu_custom_call.1} parent=1 // pred_check_branch
      %26 = sbr.rel (0) target = $region9
    $region8: #{tpu_custom_call.1} parent=1 // pred_region
      %s28 = ssub.s32 256, 256
      %29 = vsyncadd [#allocation6], %s28
      %s30 = sshll.u32 [#allocation5], 4
      %s31 = int_to_ptr.vmem [resolvable:$true] %s30
      %36 = dma.hbm_to_vmem [thread:$0]  %s1, 256, %s31, [#allocation6], 64, 64, 4
    $region9: #{tpu_custom_call.1} parent=1 // pred_fallthru
      _
    // Predicated region
    $region10: #{tpu_custom_call.1} parent=1 // pred_check
      _
    $region11: #{tpu_custom_call.1} parent=1 // pred_check_branch
      %38 = sbr.rel (0) target = $region13
    $region12: #{tpu_custom_call.1} parent=1 // pred_region
      _
    $region13: #{tpu_custom_call.1} parent=1 // pred_fallthru
      _
    // Predicated region
    $region14: #{tpu_custom_call.1} parent=1 // pred_check
      _
    $region15: #{tpu_custom_call.1} parent=1 // pred_check_branch
      %40 = sbr.rel (0) target = $region17
    $region16: #{tpu_custom_call.1} parent=1 // pred_region
      _
    $region17: #{tpu_custom_call.1} parent=1 // pred_fallthru
      _
    // Predicated region
    $region18: #{tpu_custom_call.1} parent=1 // pred_check
      _
    $region19: #{tpu_custom_call.1} parent=1 // pred_check_branch
      %42 = sbr.rel (0) target = $region21
    $region20: #{tpu_custom_call.1} parent=1 // pred_region
      _
    $region21: #{tpu_custom_call.1} parent=1 // pred_fallthru
      _
    // Predicated region
    $region22: #{tpu_custom_call.1} parent=1 // pred_check
      _
    $region23: #{tpu_custom_call.1} parent=1 // pred_check_branch
      %44 = sbr.rel (0) target = $region25
    $region24: #{tpu_custom_call.1} parent=1 // pred_region
      %s46 = ssub.s32 1024, 1024
      %47 = vsyncadd [#allocation6], %s46
      %s48 = sshll.u32 [#allocation7], 4
      %s49 = int_to_ptr.vmem [resolvable:$true] %s48
      %54 = dma.hbm_to_vmem [thread:$0]  %s5, 1024, %s49, [#allocation6], 64, 64, 4
    $region25: #{tpu_custom_call.1} parent=1 // pred_fallthru
      _
    // Predicated region
    $region26: #{tpu_custom_call.1} parent=1 // pred_check
      _
    $region27: #{tpu_custom_call.1} parent=1 // pred_check_branch
      %56 = sbr.rel (0) target = $region29
    $region28: #{tpu_custom_call.1} parent=1 // pred_region
      _
    $region29: #{tpu_custom_call.1} parent=1 // pred_fallthru
      _
    // Predicated region
    $region30: #{tpu_custom_call.1} parent=1 // pred_check
      _
    $region31: #{tpu_custom_call.1} parent=1 // pred_check_branch
      %58 = sbr.rel (0) target = $region33
    $region32: #{tpu_custom_call.1} parent=1 // pred_region
      %59 = dma.done [#allocation3], 128
    $region33: #{tpu_custom_call.1} parent=1 // pred_fallthru
      _
    // Predicated region
    $region34: #{tpu_custom_call.1} parent=1 // pred_check
      _
    $region35: #{tpu_custom_call.1} parent=1 // pred_check_branch
      %61 = sbr.rel (0) target = $region37
    $region36: #{tpu_custom_call.1} parent=1 // pred_region
      %62 = dma.done [#allocation6], 256
    $region37: #{tpu_custom_call.1} parent=1 // pred_fallthru
      _
    // Predicated region
    $region38: #{tpu_custom_call.1} parent=1 // pred_check
      _
    $region39: #{tpu_custom_call.1} parent=1 // pred_check_branch
      %64 = sbr.rel (0) target = $region41
    $region40: #{tpu_custom_call.1} parent=1 // pred_region
      %65 = dma.done [#allocation6], 1024
    $region41: #{tpu_custom_call.1} parent=1 // pred_fallthru
      _
    %v67 = vld [vmem:[#allocation2] sm:$0xff]
    %v68 = vpack.c.bf16 %v67, %v67
    %v69 = vld [vmem:[#allocation5] sm:$0xf]
    %v70 = vld [vmem:[#allocation5 + $0x4] sm:$0xf]
    %v71 = vld [vmem:[#allocation5 + $0x8] sm:$0xf]
    %v72 = vld [vmem:[#allocation5 + $0xc] sm:$0xf]
    %v73 = vld [vmem:[%s2] sm:$0x1]
    %v75 = vlaneseq
    %v76 = vshrl.u32 %v75, 7
    %v77 = vsub.s32 0, %v76
    %v78 = vrot.slane %v73, %v77
    %v84 = vunpack.c.l.b16 %v69
    %v85 = vunpack.c.l.b16 %v70
    %v86 = vunpack.c.l.b16 %v71
    %v87 = vunpack.c.l.b16 %v72
    %v88 = vpack.c.b16 %v85, %v84
    %v89 = vpack.c.b16 %v87, %v86
    %vm92 = vcmask 261120
    %v94 = vsel %vm92, %v68, 0
    %96 = vmatprep.subr.bf16.mxu0 0
    %97 = vmatpush1.bf16.msra.mxu0 %v88
    %98 = vmatprep.subr.bf16.mxu0 0
    %99 = vmatpush1.bf16.msra.mxu0 %v89
    %100 = vmatprep.subr.bf16.mxu0 0
    %101 = vmatpush1.bf16.msra.mxu0 0
    %102 = vmatprep.subr.bf16.mxu0 0
    %103 = vmatpush1.bf16.msra.mxu0 0
    %104 = vmatprep.subr.bf16.mxu0 0
    %105 = vmatpush1.bf16.msra.mxu0 0
    %106 = vmatprep.subr.bf16.mxu0 0
    %107 = vmatpush1.bf16.msra.mxu0 0
    %108 = vmatprep.subr.bf16.mxu0 0
    %109 = vmatpush1.bf16.msra.mxu0 0
    %110 = vmatprep.subr.bf16.mxu0 0
    %111 = vmatpush1.bf16.msra.mxu0 0
    %112 = vmatprep.subr.bf16.mxu0 0
    %113 = vmatpush1.bf16.msra.mxu0 0
    %114 = vmatprep.subr.bf16.mxu0 0
    %115 = vmatpush1.bf16.msra.mxu0 0
    %116 = vmatprep.subr.bf16.mxu0 0
    %117 = vmatpush1.bf16.msra.mxu0 0
    %118 = vmatprep.subr.bf16.mxu0 0
    %119 = vmatpush1.bf16.msra.mxu0 0
    %120 = vmatprep.subr.bf16.mxu0 0
    %121 = vmatpush1.bf16.msra.mxu0 0
    %122 = vmatprep.subr.bf16.mxu0 0
    %123 = vmatpush1.bf16.msra.mxu0 0
    %124 = vmatprep.subr.bf16.mxu0 0
    %125 = vmatpush1.bf16.msra.mxu0 0
    %126 = vmatprep.subr.bf16.mxu0 0
    %127 = vmatpush1.bf16.msra.mxu0 0
    %128 = vmatprep.mubr.bf16.mxu0 0
    %129 = vmatmul.mubr.bf16.gmra.mrb[0].mxu0 %v94
    %v130 = vpop.f32.mrb[0].mxu0
    %v131 = vadd.f32 %v78, %v130
    %v132 = vpop.f32.mrb[0].mxu0
    %v133 = vpop.f32.mrb[0].mxu0
    %v134 = vpop.f32.mrb[0].mxu0
    %135 = vdwg.mxu0
    %136 = vadd.xlane.f32.xlu0 %v131
    %v137 = vpop.xlane.xlu0 %136
    %v138 = vrcp.pop 128.0
    %v139 = vmul.f32 %v137, %v138
    %v140 = vsub.f32 %v131, %v139
    %v141 = vmul.f32 %v140, %v140
    %142 = vadd.xlane.f32.xlu0 %v141
    %v143 = vpop.xlane.xlu0 %142
    %v144 = vmul.f32 %v143, %v138
    %v145 = vadd.f32 %v144, 1e-05
    %v146 = vrsqrt.pop %v145
    %v147 = vmul.f32 %v140, %v146
    %v148 = vld [vmem:[%s3] sm:$0x1]
    %v150 = vlaneseq
    %v151 = vshrl.u32 %v150, 7
    %v152 = vsub.s32 0, %v151
    %v153 = vrot.slane %v148, %v152
    %v155 = vmul.f32 %v147, %v153
    %v156 = vld [vmem:[%s4] sm:$0x1]
    %v158 = vlaneseq
    %v159 = vshrl.u32 %v158, 7
    %v160 = vsub.s32 0, %v159
    %v161 = vrot.slane %v156, %v160
    %v163 = vadd.f32 %v155, %v161
    %v164 = vmax.f32 %v163, 0.0
    %v165 = vpack.c.bf16 %v164, %v164
    %v166 = vld [vmem:[#allocation7] sm:$0xf]
    %v167 = vld [vmem:[#allocation7 + $0x4] sm:$0xf]
    %v168 = vld [vmem:[#allocation7 + $0x8] sm:$0xf]
    %v169 = vld [vmem:[#allocation7 + $0xc] sm:$0xf]
    %v170 = vld [vmem:[#allocation7 + $0x10] sm:$0xf]
    %v171 = vld [vmem:[#allocation7 + $0x14] sm:$0xf]
    %v172 = vld [vmem:[#allocation7 + $0x18] sm:$0xf]
    %v173 = vld [vmem:[#allocation7 + $0x1c] sm:$0xf]
    %v174 = vld [vmem:[#allocation7 + $0x20] sm:$0xf]
    %v175 = vld [vmem:[#allocation7 + $0x24] sm:$0xf]
    %v176 = vld [vmem:[#allocation7 + $0x28] sm:$0xf]
    %v177 = vld [vmem:[#allocation7 + $0x2c] sm:$0xf]
    %v178 = vld [vmem:[#allocation7 + $0x30] sm:$0xf]
    %v179 = vld [vmem:[#allocation7 + $0x34] sm:$0xf]
    %v180 = vld [vmem:[#allocation7 + $0x38] sm:$0xf]
    %v181 = vld [vmem:[#allocation7 + $0x3c] sm:$0xf]
    %v182 = vld [vmem:[%s6] sm:$0x1]
    %v184 = vlaneseq
    %v185 = vshrl.u32 %v184, 7
    %v186 = vsub.s32 0, %v185
    %v187 = vrot.slane %v182, %v186
    %v205 = vunpack.c.l.b16 %v166
    %v206 = vunpack.c.l.b16 %v167
    %v207 = vunpack.c.l.b16 %v168
    %v208 = vunpack.c.l.b16 %v169
    %v209 = vunpack.c.l.b16 %v170
    %v210 = vunpack.c.l.b16 %v171
    %v211 = vunpack.c.l.b16 %v172
    %v212 = vunpack.c.l.b16 %v173
    %v213 = vunpack.c.l.b16 %v174
    %v214 = vunpack.c.l.b16 %v175
    %v215 = vunpack.c.l.b16 %v176
    %v216 = vunpack.c.l.b16 %v177
    %v217 = vunpack.c.l.b16 %v178
    %v218 = vunpack.c.l.b16 %v179
    %v219 = vunpack.c.l.b16 %v180
    %v220 = vunpack.c.l.b16 %v181
    %v221 = vpack.c.b16 %v206, %v205
    %v222 = vpack.c.b16 %v208, %v207
    %v223 = vpack.c.b16 %v210, %v209
    %v224 = vpack.c.b16 %v212, %v211
    %v225 = vpack.c.b16 %v214, %v213
    %v226 = vpack.c.b16 %v216, %v215
    %v227 = vpack.c.b16 %v218, %v217
    %v228 = vpack.c.b16 %v220, %v219
    %237 = vmatprep.subr.bf16.mxu0 0
    %238 = vmatpush1.bf16.msra.mxu0 %v221
    %239 = vmatprep.subr.bf16.mxu0 0
    %240 = vmatpush1.bf16.msra.mxu0 %v222
    %241 = vmatprep.subr.bf16.mxu0 0
    %242 = vmatpush1.bf16.msra.mxu0 %v223
    %243 = vmatprep.subr.bf16.mxu0 0
    %244 = vmatpush1.bf16.msra.mxu0 %v224
    %245 = vmatprep.subr.bf16.mxu0 0
    %246 = vmatpush1.bf16.msra.mxu0 %v225
    %247 = vmatprep.subr.bf16.mxu0 0
    %248 = vmatpush1.bf16.msra.mxu0 %v226
    %249 = vmatprep.subr.bf16.mxu0 0
    %250 = vmatpush1.bf16.msra.mxu0 %v227
    %251 = vmatprep.subr.bf16.mxu0 0
    %252 = vmatpush1.bf16.msra.mxu0 %v228
    %253 = vmatprep.subr.bf16.mxu0 0
    %254 = vmatpush1.bf16.msra.mxu0 0
    %255 = vmatprep.subr.bf16.mxu0 0
    %256 = vmatpush1.bf16.msra.mxu0 0
    %257 = vmatprep.subr.bf16.mxu0 0
    %258 = vmatpush1.bf16.msra.mxu0 0
    %259 = vmatprep.subr.bf16.mxu0 0
    %260 = vmatpush1.bf16.msra.mxu0 0
    %261 = vmatprep.subr.bf16.mxu0 0
    %262 = vmatpush1.bf16.msra.mxu0 0
    %263 = vmatprep.subr.bf16.mxu0 0
    %264 = vmatpush1.bf16.msra.mxu0 0
    %265 = vmatprep.subr.bf16.mxu0 0
    %266 = vmatpush1.bf16.msra.mxu0 0
    %267 = vmatprep.subr.bf16.mxu0 0
    %268 = vmatpush1.bf16.msra.mxu0 0
    %269 = vmatprep.mubr.bf16.mxu0 0
    %270 = vmatmul.mubr.bf16.gmra.mrb[0].mxu0 %v165
    %v271 = vpop.f32.mrb[0].mxu0
    %v272 = vadd.f32 %v187, %v271
    %v273 = vpop.f32.mrb[0].mxu0
    %v274 = vpop.f32.mrb[0].mxu0
    %v275 = vpop.f32.mrb[0].mxu0
    %276 = vdwg.mxu0
    %277 = vmax.xlane.f32.xlu0 %v272
    %v278 = vpop.xlane.xlu0 %277
    %v279 = vsub.f32 %v272, %v278
    %v280 = vmul.f32 %v279, 1.442695
    %v281 = vpow.pop %v280
    %282 = vadd.xlane.f32.xlu0 %v281
    %v283 = vpop.xlane.xlu0 %282
    %v284 = vlog2.pop %v283
    %v285 = vmul.f32 %v284, 0.6931472
    %v286 = vadd.f32 %v278, %v285
    %v287 = vsub.f32 %v272, %v286
    %288 = vst [vmem:[#allocation8] sm:$0xff] %v287
    // Predicated region
    $region42: #{tpu_custom_call.1} parent=1 // pred_check
      _
    $region43: #{tpu_custom_call.1} parent=1 // pred_check_branch
      %290 = sbr.rel (0) target = $region45
    $region44: #{tpu_custom_call.1} parent=1 // pred_region
      %s292 = ssub.s32 128, 128
      %293 = vsyncadd [#allocation4], %s292
      %s295 = sshll.u32 [#allocation8], 4
      %s296 = int_to_ptr.vmem [resolvable:$true] %s295
      %298 = dma.vmem_to_hbm [thread:$0]  %s296, 128, %s7, [#allocation4]
    $region45: #{tpu_custom_call.1} parent=1 // pred_fallthru
      _
    // Predicated region
    $region46: #{tpu_custom_call.1} parent=1 // pred_check
      _
    $region47: #{tpu_custom_call.1} parent=1 // pred_check_branch
      %300 = sbr.rel (0) target = $region49
    $region48: #{tpu_custom_call.1} parent=1 // pred_region
      %301 = dma.done [#allocation4], 128
    $region49: #{tpu_custom_call.1} parent=1 // pred_fallthru
      _
    %302 = vsyncpa [#allocation3], 1
    %303 = vsyncpa [#allocation6], 1
    %304 = vsyncpa [#allocation4], 1

</llo_original>
